<compile_context>
chip_gen: v5e
topology: v5e:2x2
jax: 0.10.0
libtpu: 0.0.40
codegen_flags: <defaults>
</compile_context>

<pallas_src>
import functools

import jax
import jax.numpy as jnp
from jax.experimental import pallas as pl
from jax.experimental.pallas import tpu as pltpu

_LANE = 128
_SUBLANE = 8


# -----------------------------------------------------------------------------
# hardware / tile-size helpers
# -----------------------------------------------------------------------------
def _round_down(v, m):
    return max((v // m) * m, 0)


def _vmem_capacity_bytes():
    try:
        return int(pltpu.get_tpu_info().vmem_capacity_bytes)
    except Exception:
        # Conservative fallback (v7x: 64 MiB / TC).  Callers on v5e/v6e can pass
        # vmem_bytes=128<<20 explicitly if the trace-time query is unavailable.
        return 64 * 1024 * 1024


def _num_tensorcores():
    """Megacore generations (v4 / v5p / v7x) shard 'parallel' grid axes over 2 TCs."""
    try:
        kind = jax.devices()[0].device_kind.lower()
    except Exception:
        return 1
    if "v7" in kind or "v4" in kind:
        return 2
    if "v5" in kind and "lite" not in kind and "v5e" not in kind:
        return 2  # v5p
    return 1


def _feature_tiles(d):
    """Candidate feature-tile widths, widest first (lane-aligned where possible)."""
    if d < _LANE:
        return [d]                                   # full (non-aligned) feature dim
    if d % _LANE == 0:
        base = d // _LANE
        return [k * _LANE for k in range(base, 0, -1) if base % k == 0]
    up = -(-d // _LANE)                              # ragged last tile handled by cdiv grid
    return [k * _LANE for k in range(up, 0, -1)]


# ------------------------- VMEM byte models (per review) ----------------------
def _single_pass_bytes(n, td, db):
    # double-buffered input block + double-buffered output block; min/max runs in
    # the native dtype and the f32 math is fused per-vreg (no full f32 temp).
    return 4 * n * td * db


def _resident_bytes(n, td, tn, db):
    n_pad = -(-n // tn) * tn
    # resident strip + double-buffered streamed input block + (1, td) f32 accumulators
    return td * db * (n_pad + 2 * tn) + 2 * td * 4


def _pass1_bytes(tn, td, db):
    # double-buffered input block + two tiny resident (1, td) f32 outputs (x2 buffers)
    return 2 * tn * td * db + 16 * td


def _pass2_bytes_per_row(td, db):
    # double-buffered input + double-buffered output per row of tn
    return 4 * td * db


# ------------------------------ tile choosers ---------------------------------
def _pick_single_td(n, d, db, budget, num_cores, tiles):
    fitting = [t for t in tiles if _single_pass_bytes(n, t, db) <= budget]
    if not fitting:
        return None
    target = 4 * max(1, num_cores)                   # ~4 grid steps per TensorCore
    for pred in (
        lambda t: -(-d // t) >= target and t >= 4 * _LANE,
        lambda t: -(-d // t) >= target,
        lambda t: num_cores > 1 and -(-d // t) >= num_cores,
    ):
        good = [t for t in fitting if pred(t)]
        if good:
            return good[0]                           # widest tile meeting the goal
    return fitting[0]                                # 1-TC chips: widest contiguous strip


def _pick_resident(n, d, db, budget, num_cores, tiles):
    cand = [t for t in tiles if d % t == 0] or [d]   # strip writeback needs exact width
    n_pad8 = -(-n // _SUBLANE) * _SUBLANE
    fitting = []
    for td in cand:
        tn = min(n_pad8, max(_SUBLANE, _round_down((8 << 20) // (td * db), _SUBLANE)))
        tn = max(tn, _SUBLANE)
        while tn > _SUBLANE and _resident_bytes(n, td, tn, db) > budget:
            tn = max(_SUBLANE, _round_down(tn // 2, _SUBLANE))
        if _resident_bytes(n, td, tn, db) <= budget:
            fitting.append((td, tn))
    if not fitting:
        return None
    if num_cores > 1:
        multi = [c for c in fitting if -(-d // c[0]) >= num_cores]
        if multi:
            return multi[0]
    return fitting[0]


def _pick_two_pass(n, d, db, budget, num_cores, tiles):
    cand = list(tiles)
    if num_cores > 1 and len(cand) > 1:
        narrowed = [t for t in cand if -(-d // t) >= num_cores]
        if narrowed:
            cand = narrowed                          # keep both TCs busy in pass 1
    td = next((t for t in cand if _pass1_bytes(_SUBLANE, t, db) <= budget), cand[-1])
    n_pad8 = -(-n // _SUBLANE) * _SUBLANE
    tn1 = max(_SUBLANE, _round_down((budget - 16 * td) // (2 * td * db), _SUBLANE))
    tn1 = min(tn1, n_pad8)                           # no artificial 4096 cap (review)
    tn2 = max(_SUBLANE, _round_down((budget - 16 * td) // _pass2_bytes_per_row(td, db),
                                    _SUBLANE))
    tn2 = min(tn2, n_pad8)
    return td, tn1, tn2


# -----------------------------------------------------------------------------
# kernels
# -----------------------------------------------------------------------------
def _single_pass_kernel(x_ref, o_ref):
    x = x_ref[...]                                   # (N, td), native dtype
    mn = jnp.min(x, axis=0, keepdims=True).astype(jnp.float32)   # exact in bf16/f32
    mx = jnp.max(x, axis=0, keepdims=True).astype(jnp.float32)
    inv = pl.reciprocal(mx - mn, approx=False)       # keeps inf/nan reference behavior
    o_ref[...] = ((x.astype(jnp.float32) - mn) * inv).astype(o_ref.dtype)


def _resident_strip_kernel(x_ref, o_hbm, strip, mn_sc, mx_sc, sem,
                           *, n_rows, tn, td, n_blocks):
    dj = pl.program_id(0)
    ni = pl.program_id(1)
    last = n_blocks - 1

    @pl.when(ni == 0)
    def _init():
        mn_sc[...] = jnp.full(mn_sc.shape, jnp.inf, mn_sc.dtype)
        mx_sc[...] = jnp.full(mx_sc.shape, -jnp.inf, mx_sc.dtype)

    x = x_ref[...]                                   # (tn, td) streamed block
    row0 = pl.multiple_of(ni * tn, _SUBLANE)
    strip[pl.ds(row0, tn), :] = x                    # stage the column strip in VMEM

    def _acc(x_min, x_max):
        mn_sc[...] = jnp.minimum(
            mn_sc[...], jnp.min(x_min, axis=0, keepdims=True).astype(jnp.float32))
        mx_sc[...] = jnp.maximum(
            mx_sc[...], jnp.max(x_max, axis=0, keepdims=True).astype(jnp.float32))

    if n_rows % tn == 0:
        _acc(x, x)                                   # no ragged tail: never mask
    else:
        @pl.when(ni != last)
        def _full():
            _acc(x, x)

        @pl.when(ni == last)                         # mask only the ragged last block
        def _ragged():
            row = jax.lax.broadcasted_iota(jnp.int32, x.shape, 0)
            valid = row < (n_rows - ni * tn)
            _acc(jnp.where(valid, x, jnp.array(jnp.inf, x.dtype)),
                 jnp.where(valid, x, jnp.array(-jnp.inf, x.dtype)))

    @pl.when(ni == last)
    def _normalize_and_writeback():
        mn = mn_sc[...]
        inv = pl.reciprocal(mx_sc[...] - mn, approx=False)

        def _norm_chunk(i, carry):                   # chunked: bounded VMEM temporaries
            r0 = pl.multiple_of(i * tn, _SUBLANE)
            blk = strip[pl.ds(r0, tn), :]
            strip[pl.ds(r0, tn), :] = (
                (blk.astype(jnp.float32) - mn) * inv).astype(strip.dtype)
            return carry

        jax.lax.fori_loop(0, n_blocks, _norm_chunk, 0)

        col0 = dj * td
        if td % _LANE == 0:
            col0 = pl.multiple_of(col0, _LANE)
        cp = pltpu.make_async_copy(
            strip.at[pl.ds(0, n_rows), :],
            o_hbm.at[pl.ds(0, n_rows), pl.ds(col0, td)],
            sem)
        cp.start()
        cp.wait()   # step-local DMA: safe under megacore sharding of the strip axis


def _minmax_pass_kernel(x_ref, mn_ref, mx_ref, *, n_rows, tn, n_blocks):
    ni = pl.program_id(1)
    last = n_blocks - 1

    @pl.when(ni == 0)
    def _init():
        mn_ref[...] = jnp.full(mn_ref.shape, jnp.inf, mn_ref.dtype)
        mx_ref[...] = jnp.full(mx_ref.shape, -jnp.inf, mx_ref.dtype)

    x = x_ref[...]

    def _acc(x_min, x_max):
        mn_ref[...] = jnp.minimum(
            mn_ref[...], jnp.min(x_min, axis=0, keepdims=True).astype(jnp.float32))
        mx_ref[...] = jnp.maximum(
            mx_ref[...], jnp.max(x_max, axis=0, keepdims=True).astype(jnp.float32))

    if n_rows % tn == 0:
        _acc(x, x)
    else:
        @pl.when(ni != last)
        def _full():
            _acc(x, x)

        @pl.when(ni == last)                         # masking only on the ragged block
        def _ragged():
            row = jax.lax.broadcasted_iota(jnp.int32, x.shape, 0)
            valid = row < (n_rows - ni * tn)
            _acc(jnp.where(valid, x, jnp.array(jnp.inf, x.dtype)),
                 jnp.where(valid, x, jnp.array(-jnp.inf, x.dtype)))


def _normalize_pass_kernel(x_ref, mn_ref, mx_ref, o_ref):
    mn = mn_ref[...]
    inv = pl.reciprocal(mx_ref[...] - mn, approx=False)
    o_ref[...] = ((x_ref[...].astype(jnp.float32) - mn) * inv).astype(o_ref.dtype)


# -----------------------------------------------------------------------------
# wrapper
# -----------------------------------------------------------------------------
def fmaxmin(x, *, vmem_bytes=None, block_budget_bytes=None, force_path=None):
    """Per-feature min/max normalization over dim 0: (x - min) / (max - min)."""
    assert x.ndim == 2, "FMaxMin expects a 2-D (N, D) input"
    n, d = x.shape
    db = x.dtype.itemsize

    cap = int(vmem_bytes) if vmem_bytes is not None else _vmem_capacity_bytes()
    cap = min(max(cap, 16 << 20), 128 << 20)
    vmem_limit = int(cap * 0.9)
    budget = (int(block_budget_bytes) if block_budget_bytes is not None
              else int(vmem_limit * 0.8))
    num_cores = _num_tensorcores()
    tiles = _feature_tiles(d)

    # ---------------- path 1: single pass (1R + 1W of x) ----------------------
    if force_path in (None, "single"):
        td = _pick_single_td(n, d, db, budget, num_cores, tiles)
        if td is None and force_path == "single":
            td = tiles[-1]
        if td is not None:
            gd = -(-d // td)
            return pl.pallas_call(
                _single_pass_kernel,
                out_shape=jax.ShapeDtypeStruct((n, d), x.dtype),
                grid_spec=pltpu.PrefetchScalarGridSpec(
                    num_scalar_prefetch=0,
                    grid=(gd,),
                    in_specs=[pl.BlockSpec((n, td), lambda j: (0, j))],
                    out_specs=pl.BlockSpec((n, td), lambda j: (0, j)),
                ),
                compiler_params=pltpu.CompilerParams(
                    dimension_semantics=("parallel",),
                    vmem_limit_bytes=vmem_limit,
                ),
                cost_estimate=pl.CostEstimate(
                    flops=5 * n * d, transcendentals=d,
                    bytes_accessed=2 * n * d * db),
            )(x)

    # ---------------- path 2: resident column strip (still 1R + 1W) -----------
    if force_path in (None, "resident"):
        picked = _pick_resident(n, d, db, budget, num_cores, tiles)
        if picked is None and force_path == "resident":
            picked = (([t for t in tiles if d % t == 0] or [d])[-1], _SUBLANE)
        if picked is not None:
            td, tn = picked
            nb = -(-n // tn)
            gd = -(-d // td)
            kernel = functools.partial(
                _resident_strip_kernel, n_rows=n, tn=tn, td=td, n_blocks=nb)
            return pl.pallas_call(
                kernel,
                out_shape=jax.ShapeDtypeStruct((n, d), x.dtype),
                grid_spec=pltpu.PrefetchScalarGridSpec(
                    num_scalar_prefetch=0,
                    grid=(gd, nb),
                    in_specs=[pl.BlockSpec((tn, td), lambda dj, ni: (ni, dj))],
                    out_specs=pl.BlockSpec(memory_space=pl.ANY),
                    scratch_shapes=[
                        pltpu.VMEM((nb * tn, td), x.dtype),      # resident strip
                        pltpu.VMEM((1, td), jnp.float32),        # mn
                        pltpu.VMEM((1, td), jnp.float32),        # mx
                        pltpu.SemaphoreType.DMA(()),             # writeback sem
                    ],
                ),
                compiler_params=pltpu.CompilerParams(
                    dimension_semantics=("parallel", "arbitrary"),
                    vmem_limit_bytes=vmem_limit,
                ),
                cost_estimate=pl.CostEstimate(
                    flops=5 * n * d, transcendentals=d,
                    bytes_accessed=2 * n * d * db),
            )(x)

    # ---------------- path 3: two-pass fallback for very tall N ---------------
    td, tn1, tn2 = _pick_two_pass(n, d, db, budget, num_cores, tiles)
    gd = -(-d // td)
    nb1 = -(-n // tn1)
    nb2 = -(-n // tn2)

    minmax_kernel = functools.partial(_minmax_pass_kernel, n_rows=n, tn=tn1, n_blocks=nb1)
    mn, mx = pl.pallas_call(
        minmax_kernel,
        out_shape=(jax.ShapeDtypeStruct((1, d), jnp.float32),
                   jax.ShapeDtypeStruct((1, d), jnp.float32)),
        grid_spec=pltpu.PrefetchScalarGridSpec(
            num_scalar_prefetch=0,
            grid=(gd, nb1),                              # reduction axis (N) last
            in_specs=[pl.BlockSpec((tn1, td), lambda dj, ni: (ni, dj))],
            out_specs=[pl.BlockSpec((1, td), lambda dj, ni: (0, dj)),
                       pl.BlockSpec((1, td), lambda dj, ni: (0, dj))],
        ),
        compiler_params=pltpu.CompilerParams(
            dimension_semantics=("parallel", "arbitrary"),
            vmem_limit_bytes=vmem_limit,
        ),
        cost_estimate=pl.CostEstimate(
            flops=2 * n * d, transcendentals=0,
            bytes_accessed=n * d * db + 8 * d),
    )(x)

    return pl.pallas_call(
        _normalize_pass_kernel,
        out_shape=jax.ShapeDtypeStruct((n, d), x.dtype),
        grid_spec=pltpu.PrefetchScalarGridSpec(
            num_scalar_prefetch=0,
            grid=(gd, nb2),                              # D outermost: mn/mx stay resident
            in_specs=[pl.BlockSpec((tn2, td), lambda dj, ni: (ni, dj)),
                      pl.BlockSpec((1, td), lambda dj, ni: (0, dj)),
                      pl.BlockSpec((1, td), lambda dj, ni: (0, dj))],
            out_specs=pl.BlockSpec((tn2, td), lambda dj, ni: (ni, dj)),
        ),
        compiler_params=pltpu.CompilerParams(
            dimension_semantics=("parallel", "arbitrary"),
            vmem_limit_bytes=vmem_limit,
        ),
        cost_estimate=pl.CostEstimate(
            flops=3 * n * d, transcendentals=d,
            bytes_accessed=2 * n * d * db + 8 * d),
    )(x, mn, mx)


# -----------------------------------------------------------------------------
# reference + tests
# -----------------------------------------------------------------------------
def fmaxmin_ref(x):
    xf = x.astype(jnp.float32)
    mn = jnp.min(xf, axis=0)
    mx = jnp.max(xf, axis=0)
    return ((xf - mn[None, :]) / (mx - mn)[None, :]).astype(x.dtype)


if __name__ == "__main__":
    key = jax.random.PRNGKey(0)
    k0, k1, k2, k3, k4, k5 = jax.random.split(key, 6)

    # 1) Default path selection (single pass) at a small shape.
    x0 = jax.random.normal(k0, (16, 256), dtype=jnp.float32)
    out0 = jax.block_until_ready(fmaxmin(x0))
    assert out0.shape == x0.shape and out0.dtype == x0.dtype
    assert jnp.allclose(out0, fmaxmin_ref(x0), atol=1e-5, rtol=1e-5)

    # 2) Resident-strip path: multi-strip, multi-step (streamed min/max, in-VMEM
    #    normalize, manual DMA writeback).
    x1 = jax.random.normal(k1, (64, 256), dtype=jnp.float32)
    out1 = jax.block_until_ready(
        fmaxmin(x1, force_path="resident", block_budget_bytes=72 * 1024))
    assert jnp.allclose(out1, fmaxmin_ref(x1), atol=1e-5, rtol=1e-5)

    # 3) Two-pass fallback with ragged N (exercises the pl.when-gated row mask).
    x2 = jax.random.normal(k2, (20, 256), dtype=jnp.float32)
    out2 = jax.block_until_ready(
        fmaxmin(x2, force_path="two_pass", block_budget_bytes=32 * 1024))
    assert jnp.allclose(out2, fmaxmin_ref(x2), atol=1e-5, rtol=1e-5)

    # 4) Non-lane-aligned feature dim (ragged last feature tile).
    x3 = jax.random.normal(k3, (24, 160), dtype=jnp.float32)
    out3 = jax.block_until_ready(fmaxmin(x3))
    assert jnp.allclose(out3, fmaxmin_ref(x3), atol=1e-5, rtol=1e-5)

    # 5) bf16: min/max reduced natively in bf16 (exact), normalize math in f32.
    x4 = jax.random.normal(k4, (32, 256), dtype=jnp.float32).astype(jnp.bfloat16)
    out4 = jax.block_until_ready(fmaxmin(x4, force_path="resident"))
    assert jnp.allclose(out4.astype(jnp.float32),
                        fmaxmin_ref(x4).astype(jnp.float32), atol=2e-2, rtol=2e-2)

    # 6) Resident path with ragged N (masked tail + partial-strip writeback DMA).
    x5 = jax.random.normal(k5, (20, 128), dtype=jnp.float32)
    out5 = jax.block_until_ready(fmaxmin(x5, force_path="resident"))
    assert jnp.allclose(out5, fmaxmin_ref(x5), atol=1e-5, rtol=1e-5)

    print("KERNEL_OK")
</pallas_src>

<mosaic_0001>
module attributes {stable_mosaic.version = 11 : i64} {
  func.func @_single_pass_kernel(%arg0: i32, %arg1: memref<16x256xf32, #tpu.memory_space<vmem>>, %arg2: memref<16x256xf32, #tpu.memory_space<vmem>>) attributes {dimension_semantics = [#tpu.dimension_semantics<parallel>], iteration_bounds = array<i64: 1>, scalar_prefetch = 0 : i64, scratch_operands = 0 : i64, tpu.core_type = #tpu.core_type<tc>, window_params = [{transform_indices = @transform_0, window_bounds = array<i64: 16, 256>}, {transform_indices = @transform_1, window_bounds = array<i64: 16, 256>}]} {
    %c0 = arith.constant 0 : index
    %c0_0 = arith.constant 0 : index
    %0 = vector.load %arg1[%c0, %c0_0] : memref<16x256xf32, #tpu.memory_space<vmem>>, vector<16x256xf32>
    %cst = arith.constant dense<0x7F800000> : vector<256xf32>
    %1 = vector.multi_reduction <minimumf>, %0, %cst [0] : vector<16x256xf32> to vector<256xf32>
    %2 = vector.shape_cast %1 : vector<256xf32> to vector<1x256xf32>
    %cst_1 = arith.constant dense<0xFF800000> : vector<256xf32>
    %3 = vector.multi_reduction <maximumf>, %0, %cst_1 [0] : vector<16x256xf32> to vector<256xf32>
    %4 = vector.shape_cast %3 : vector<256xf32> to vector<1x256xf32>
    %5 = arith.subf %4, %2 : vector<1x256xf32>
    %6 = tpu.reciprocal %5 : vector<1x256xf32> -> vector<1x256xf32>
    %7 = vector.broadcast %2 : vector<1x256xf32> to vector<16x256xf32>
    %8 = arith.subf %0, %7 : vector<16x256xf32>
    %9 = vector.broadcast %6 : vector<1x256xf32> to vector<16x256xf32>
    %10 = arith.mulf %8, %9 : vector<16x256xf32>
    %c0_2 = arith.constant 0 : index
    %c0_3 = arith.constant 0 : index
    %11 = vector.load %arg2[%c0_2, %c0_3] : memref<16x256xf32, #tpu.memory_space<vmem>>, vector<16x256xf32>
    tpu.vector_store %arg2[%c0_2, %c0_3], %10 {strides = array<i32>} : memref<16x256xf32, #tpu.memory_space<vmem>>, vector<16x256xf32>,
    return
  }
  func.func @transform_0(%arg0: i32) -> (i32, i32) {
    %c0_i32 = arith.constant 0 : i32
    %c0_i32_0 = arith.constant 0 : i32
    return %c0_i32, %arg0 : i32, i32
  }
  func.func @transform_1(%arg0: i32) -> (i32, i32) {
    %c0_i32 = arith.constant 0 : i32
    %c0_i32_0 = arith.constant 0 : i32
    return %c0_i32, %arg0 : i32, i32
  }
}

</mosaic_0001>

<llo_original>
// kernel: tpu_custom_call.1
$region0: #{tpu_custom_call.1}
  #allocation0 [shape = 'u32[]', space=smem, size = 0x4, offset = 0x4, fixed_abs, tag = 'smem constant byte address 0x4 - core index']
  #allocation1 [shape = 'u32[72,128]{1,0:T(1,128)}', space=vmem, size = 0x9000, scoped, tag = 'internal scratch']
  %s0 = inlined_call_operand.hbm [shape: f32[16,256], index: 0, kind: input, shape index: {}]
  %s1 = inlined_call_operand.hbm [shape: f32[16,256], index: 1, kind: output, shape index: {}]
  %s2 = sld [smem:[#allocation0]]
  $region18: #{tpu_custom_call.1} parent=0
    _
  %s4 = ssub.s32 1, %s2
  %s5 = scalar_select 0, %s4, %s2
  $region1: #{tpu_custom_call.1} parent=0
    #allocation2 [shape = 'u8[16384]{0}', space=vmem, size = 0x4000, scoped, tag = 'input window, operand 0, single buffered']
    #allocation3 [shape = 's32[1]{0}', space=sflag, size = 0x4, scoped, tag = 'scoped memory for tpu_custom_call.1']
    #allocation4 [shape = 's32[1]{0}', space=sflag, size = 0x4, scoped, tag = 'scoped memory for tpu_custom_call.1']
    #allocation5 [shape = 'u8[16384]{0}', space=vmem, size = 0x4000, scoped, tag = 'output window, operand 0, single buffered']
    %6 = vsyncpa [#allocation3], 0
    %7 = vsyncpa [#allocation4], 0
    // Predicated region
    $region2: #{tpu_custom_call.1} parent=1 // pred_check
      _
    $region3: #{tpu_custom_call.1} parent=1 // pred_check_branch
      %9 = sbr.rel (0) target = $region5
    $region4: #{tpu_custom_call.1} parent=1 // pred_region
      %11 = vsyncadd [#allocation3], 0
      %s12 = sshll.u32 %s0, 4
      %s13 = int_to_ptr.hbm [resolvable:$true] %s12
      %s14 = sshll.u32 [#allocation2], 4
      %s15 = int_to_ptr.vmem [resolvable:$true] %s14
      %20 = dma.hbm_to_vmem [thread:$0]  %s13, 512, %s15, [#allocation3], 256, 256, 16
    $region5: #{tpu_custom_call.1} parent=1 // pred_fallthru
      _
    // Predicated region
    $region6: #{tpu_custom_call.1} parent=1 // pred_check
      _
    $region7: #{tpu_custom_call.1} parent=1 // pred_check_branch
      %22 = sbr.rel (0) target = $region9
    $region8: #{tpu_custom_call.1} parent=1 // pred_region
      %24 = dma.done [#allocation3], 512
    $region9: #{tpu_custom_call.1} parent=1 // pred_fallthru
      _
    %v25 = vld [vmem:[#allocation2] sm:$0xff]
    %v26 = vld [vmem:[#allocation2 + $0x8] sm:$0xff]
    %v27 = vld [vmem:[#allocation2 + $0x10] sm:$0xff]
    %v28 = vld [vmem:[#allocation2 + $0x18] sm:$0xff]
    %v29 = vmin.f32 %v25, %v27
    %v30 = vrot.slane %v29, 4
    %v31 = vmin.f32 %v29, %v30
    %v32 = vrot.slane %v31, 2
    %v33 = vmin.f32 %v31, %v32
    %v34 = vrot.slane %v33, 1
    %v35 = vmin.f32 %v33, %v34
    %v36 = vmin.f32 %v26, %v28
    %v37 = vrot.slane %v36, 4
    %v38 = vmin.f32 %v36, %v37
    %v39 = vrot.slane %v38, 2
    %v40 = vmin.f32 %v38, %v39
    %v41 = vrot.slane %v40, 1
    %v42 = vmin.f32 %v40, %v41
    %v43 = vmax.f32 %v25, %v27
    %v44 = vrot.slane %v43, 4
    %v45 = vmax.f32 %v43, %v44
    %v46 = vrot.slane %v45, 2
    %v47 = vmax.f32 %v45, %v46
    %v48 = vrot.slane %v47, 1
    %v49 = vmax.f32 %v47, %v48
    %v50 = vmax.f32 %v26, %v28
    %v51 = vrot.slane %v50, 4
    %v52 = vmax.f32 %v50, %v51
    %v53 = vrot.slane %v52, 2
    %v54 = vmax.f32 %v52, %v53
    %v55 = vrot.slane %v54, 1
    %v56 = vmax.f32 %v54, %v55
    %v57 = vsub.f32 %v49, %v35
    %v58 = vsub.f32 %v56, %v42
    %v59 = vrcp.pop %v57
    %v60 = vmul.f32 %v57, %v59
    %v61 = vsub.f32 1.0, %v60
    %v62 = vmul.f32 %v59, %v61
    %v63 = vadd.f32 %v59, %v62
    %vm64 = vweird.f32 %v57
    %vm65 = vweird.f32 %v59
    %vm66 = vmor %vm64, %vm65
    %v67 = vsel %vm66, %v59, %v63
    %v68 = vand.u32 2147483647, %v57
    %vm69 = vcmp.eq.f32.partialorder %v68, 8.507059e+37
    %v70 = vand.u32 %v57, 2147483648
    %v71 = vor.u32 1.1754944e-38, %v70
    %v72 = vsel %vm69, %v71, %v67
    %v73 = vrcp.pop %v58
    %v74 = vmul.f32 %v58, %v73
    %v75 = vsub.f32 1.0, %v74
    %v76 = vmul.f32 %v73, %v75
    %v77 = vadd.f32 %v73, %v76
    %vm78 = vweird.f32 %v58
    %vm79 = vweird.f32 %v73
    %vm80 = vmor %vm78, %vm79
    %v81 = vsel %vm80, %v73, %v77
    %v82 = vand.u32 2147483647, %v58
    %vm83 = vcmp.eq.f32.partialorder %v82, 8.507059e+37
    %v84 = vand.u32 %v58, 2147483648
    %v85 = vor.u32 1.1754944e-38, %v84
    %v86 = vsel %vm83, %v85, %v81
    %v87 = vsub.f32 %v25, %v35
    %v88 = vsub.f32 %v26, %v42
    %v89 = vsub.f32 %v27, %v35
    %v90 = vsub.f32 %v28, %v42
    %v91 = vmul.f32 %v87, %v72
    %v92 = vmul.f32 %v88, %v86
    %v93 = vmul.f32 %v89, %v72
    %v94 = vmul.f32 %v90, %v86
    %95 = vst [vmem:[#allocation5] sm:$0xff] %v91
    %96 = vst [vmem:[#allocation5 + $0x8] sm:$0xff] %v92
    %97 = vst [vmem:[#allocation5 + $0x10] sm:$0xff] %v93
    %98 = vst [vmem:[#allocation5 + $0x18] sm:$0xff] %v94
    // Predicated region
    $region10: #{tpu_custom_call.1} parent=1 // pred_check
      _
    $region11: #{tpu_custom_call.1} parent=1 // pred_check_branch
      %100 = sbr.rel (0) target = $region13
    $region12: #{tpu_custom_call.1} parent=1 // pred_region
      %102 = vsyncadd [#allocation4], 0
      %s103 = sshll.u32 [#allocation5], 4
      %s104 = int_to_ptr.vmem [resolvable:$true] %s103
      %s105 = sshll.u32 %s1, 4
      %s106 = int_to_ptr.hbm [resolvable:$true] %s105
      %111 = dma.vmem_to_hbm [thread:$0]  %s104, 512, %s106, [#allocation4], 256, 256, 16
    $region13: #{tpu_custom_call.1} parent=1 // pred_fallthru
      _
    // Predicated region
    $region14: #{tpu_custom_call.1} parent=1 // pred_check
      _
    $region15: #{tpu_custom_call.1} parent=1 // pred_check_branch
      %113 = sbr.rel (0) target = $region17
    $region16: #{tpu_custom_call.1} parent=1 // pred_region
      %115 = dma.done [#allocation4], 512
    $region17: #{tpu_custom_call.1} parent=1 // pred_fallthru
      _
    %116 = vsyncpa [#allocation3], 1
    %117 = vsyncpa [#allocation4], 1

</llo_original>
